<compile_context>
chip_gen: v7x
topology: tpu7x:2x2x1
jax: 0.10.0
libtpu: 0.0.40
codegen_flags: <defaults>
</compile_context>

<pallas_src>
import functools

import jax
import jax.numpy as jnp
from jax.experimental import pallas as pl
from jax.experimental.pallas import tpu as pltpu


def _temporal_attn_kernel(x_ref, conv_ref, enc_ref, w_ref, b_ref,
                          comb_ref, attn_ref, *, neg_slope):
    # x_ref   : (P, T, C)   input_data block
    # conv_ref: (P, T, D)   input_conved block (already permuted to [..., T, D])
    # enc_ref : (P, S, D)   encoder_output block
    # w_ref   : (C, D)      Linear weight (transposed to x @ W layout)
    # b_ref   : (1, D)      Linear bias
    # comb_ref: (P, T, D)   attention_combine (before final permute)
    # attn_ref: (P, T, S)   attention
    P, T, C = x_ref.shape
    D = w_ref.shape[1]

    # Elementwise / softmax math in f32 (v5e has no bf16 VPU/EUP).
    x = x_ref[...].astype(jnp.float32)          # (P, T, C)
    conv = conv_ref[...].astype(jnp.float32)    # (P, T, D)
    enc = enc_ref[...].astype(jnp.float32)      # (P, S, D)
    w = w_ref[...].astype(jnp.float32)          # (C, D)
    b = b_ref[...].astype(jnp.float32)          # (1, D)

    # MLP((in_c, hid_c)) == Linear(in_c, hid_c) + LeakyReLU(0.01).
    # Fold P*T onto the M/sublane axis: one (P*T, C) x (C, D) MXU matmul.
    x2 = x.reshape(P * T, C)
    emb2 = jnp.dot(x2, w, preferred_element_type=jnp.float32) + b
    emb2 = jnp.where(emb2 >= 0, emb2, neg_slope * emb2)
    emb = emb2.reshape(P, T, D)

    # input_combined = (input_conved.permute(0,2,3,1) + input_embedded) * 0.5
    comb = (conv + emb) * 0.5

    # energy[p,t,s] = sum_d comb[p,t,d] * enc[p,s,d]
    # (contract D of both operands directly — no materialized enc transpose).
    energy = jnp.einsum('ptd,psd->pts', comb, enc,
                        preferred_element_type=jnp.float32)

    # softmax over src_len
    m = jnp.max(energy, axis=-1, keepdims=True)
    e = jnp.exp(energy - m)
    denom = jnp.sum(e, axis=-1, keepdims=True)
    attn = e * pl.reciprocal(denom, approx=True)   # EUP vrcp, off the VALU path

    # attention_encoding = attention @ encoder_output
    attn_enc = jnp.einsum('pts,psd->ptd', attn, enc,
                          preferred_element_type=jnp.float32)

    # attention_combine = (input_embedded + attention_encoding) * 0.5
    comb_ref[...] = ((emb + attn_enc) * 0.5).astype(comb_ref.dtype)
    attn_ref[...] = attn.astype(attn_ref.dtype)


def _choose_block_pairs(bn, per_pair_bytes, *, budget_bytes=8 << 20, cap=512):
    """Largest divisor of bn fitting the VMEM budget (no padding required).

    Budget is sized conservatively (8 MiB of double-buffered tiles) so the
    pipeline stays well inside v7x's 64 MiB physical / 32 MiB scoped VMEM.
    """
    p_max = max(1, min(cap, budget_bytes // max(per_pair_bytes, 1), bn))
    if bn >= 2:
        # keep at least 2 grid steps so v7x's two TensorCores both get work
        p_max = min(p_max, max(1, bn // 2))
    for p in range(int(p_max), 0, -1):
        if bn % p == 0:
            return p
    return 1


def temporal_attn(encoder_output, input_data, input_conved, weight, bias,
                  *, neg_slope=0.01, block_pairs=None):
    """
    encoder_output: [B, N, S, D]
    input_data    : [B, N, T, C]
    input_conved  : [B, D, N, T]
    weight        : [D, C]   (PyTorch nn.Linear weight layout)
    bias          : [D]
    returns (attention_combine [B, D, N, T], attention [B, N, T, S])
    """
    B, N, S, D = encoder_output.shape
    _, _, T, C = input_data.shape
    BN = B * N

    x = input_data.reshape(BN, T, C)
    enc = encoder_output.reshape(BN, S, D)
    # [B, D, N, T] -> [B, N, T, D] -> [BN, T, D]
    # TODO(synk): fold this permute into the kernel (BlockSpec on the raw
    # [B, D, N, T] layout + in-kernel transpose) to save one HBM pass.
    conv = jnp.transpose(input_conved, (0, 2, 3, 1)).reshape(BN, T, D)
    w_t = weight.T                      # (C, D)
    b2 = bias.reshape(1, D)             # (1, D)

    out_dtype = jnp.float32

    if block_pairs is None:
        per_pair = 2 * (T * C * x.dtype.itemsize
                        + T * D * conv.dtype.itemsize
                        + S * D * enc.dtype.itemsize
                        + T * D * jnp.dtype(out_dtype).itemsize
                        + T * S * jnp.dtype(out_dtype).itemsize)
        block_pairs = _choose_block_pairs(BN, per_pair)
    P = block_pairs
    assert BN % P == 0, "block_pairs must divide B*N"

    kernel = functools.partial(_temporal_attn_kernel, neg_slope=neg_slope)

    comb, attn = pl.pallas_call(
        kernel,
        out_shape=(
            jax.ShapeDtypeStruct((BN, T, D), out_dtype),
            jax.ShapeDtypeStruct((BN, T, S), out_dtype),
        ),
        grid_spec=pltpu.PrefetchScalarGridSpec(
            num_scalar_prefetch=0,
            grid=(BN // P,),
            in_specs=[
                pl.BlockSpec((P, T, C), lambda i: (i, 0, 0)),
                pl.BlockSpec((P, T, D), lambda i: (i, 0, 0)),
                pl.BlockSpec((P, S, D), lambda i: (i, 0, 0)),
                pl.BlockSpec((C, D), lambda i: (0, 0)),
                pl.BlockSpec((1, D), lambda i: (0, 0)),
            ],
            out_specs=[
                pl.BlockSpec((P, T, D), lambda i: (i, 0, 0)),
                pl.BlockSpec((P, T, S), lambda i: (i, 0, 0)),
            ],
        ),
        compiler_params=pltpu.CompilerParams(
            dimension_semantics=("parallel",),
            vmem_limit_bytes=32 * 1024 * 1024),
    )(x, conv, enc, w_t, b2)

    attention_combine = jnp.transpose(comb.reshape(B, N, T, D), (0, 3, 1, 2))
    attention = attn.reshape(B, N, T, S)
    return attention_combine, attention


def temporal_attn_ref(encoder_output, input_data, input_conved, weight, bias,
                      neg_slope=0.01):
    """Pure-JAX reference matching the PyTorch forward."""
    emb = jnp.einsum('bntc,dc->bntd', input_data, weight) + bias
    emb = jnp.where(emb >= 0, emb, neg_slope * emb)
    conv = jnp.transpose(input_conved, (0, 2, 3, 1))
    comb = (conv + emb) * 0.5
    energy = jnp.einsum('bntd,bnsd->bnts', comb, encoder_output)
    attn = jax.nn.softmax(energy, axis=-1)
    attn_enc = jnp.einsum('bnts,bnsd->bntd', attn, encoder_output)
    out = (emb + attn_enc) * 0.5
    return jnp.transpose(out, (0, 3, 1, 2)), attn


if __name__ == "__main__":
    # Small shapes consistent with the module.
    B, N = 2, 4
    src_len, trg_len = 8, 8
    in_c, hid_c = 16, 32   # C = in_c, D = hid_c

    key = jax.random.PRNGKey(0)
    k1, k2, k3, k4, k5 = jax.random.split(key, 5)

    encoder_output = jax.random.normal(k1, (B, N, src_len, hid_c), jnp.float32)
    input_data = jax.random.normal(k2, (B, N, trg_len, in_c), jnp.float32)
    input_conved = jax.random.normal(k3, (B, hid_c, N, trg_len), jnp.float32)

    # Deterministic parameter init (nn.Linear(in_c, hid_c) shapes).
    weight = jax.random.normal(k4, (hid_c, in_c), jnp.float32) * 0.1
    bias = jax.random.normal(k5, (hid_c,), jnp.float32) * 0.1

    comb, attn = temporal_attn(encoder_output, input_data, input_conved,
                               weight, bias)
    jax.block_until_ready((comb, attn))

    comb_ref, attn_ref = temporal_attn_ref(encoder_output, input_data,
                                           input_conved, weight, bias)

    assert comb.shape == (B, hid_c, N, trg_len)
    assert attn.shape == (B, N, trg_len, src_len)
    # Tolerance slightly loosened vs. exact softmax because of
    # pl.reciprocal(approx=True) in the softmax normalization.
    assert jnp.allclose(comb, comb_ref, atol=5e-3, rtol=5e-3)
    assert jnp.allclose(attn, attn_ref, atol=5e-3, rtol=5e-3)

    print("KERNEL_OK")
</pallas_src>

<mosaic_0001>
module attributes {stable_mosaic.version = 11 : i64} {
  func.func @_temporal_attn_kernel(%arg0: i32, %arg1: memref<4x8x16xf32, #tpu.memory_space<vmem>>, %arg2: memref<4x8x32xf32, #tpu.memory_space<vmem>>, %arg3: memref<4x8x32xf32, #tpu.memory_space<vmem>>, %arg4: memref<16x32xf32, #tpu.memory_space<vmem>>, %arg5: memref<1x32xf32, #tpu.memory_space<vmem>>, %arg6: memref<4x8x32xf32, #tpu.memory_space<vmem>>, %arg7: memref<4x8x8xf32, #tpu.memory_space<vmem>>) attributes {dimension_semantics = [#tpu.dimension_semantics<parallel>], iteration_bounds = array<i64: 2>, scalar_prefetch = 0 : i64, scratch_operands = 0 : i64, tpu.core_type = #tpu.core_type<tc>, window_params = [{transform_indices = @transform_0, window_bounds = array<i64: 4, 8, 16>}, {transform_indices = @transform_1, window_bounds = array<i64: 4, 8, 32>}, {transform_indices = @transform_2, window_bounds = array<i64: 4, 8, 32>}, {pipeline_mode = #tpu.pipeline_mode<synchronous>, transform_indices = @transform_3, window_bounds = array<i64: 16, 32>}, {pipeline_mode = #tpu.pipeline_mode<synchronous>, transform_indices = @transform_4, window_bounds = array<i64: 1, 32>}, {transform_indices = @transform_5, window_bounds = array<i64: 4, 8, 32>}, {transform_indices = @transform_6, window_bounds = array<i64: 4, 8, 8>}]} {
    %c0 = arith.constant 0 : index
    %c0_0 = arith.constant 0 : index
    %c0_1 = arith.constant 0 : index
    %0 = vector.load %arg1[%c0, %c0_0, %c0_1] : memref<4x8x16xf32, #tpu.memory_space<vmem>>, vector<4x8x16xf32>
    %c0_2 = arith.constant 0 : index
    %c0_3 = arith.constant 0 : index
    %c0_4 = arith.constant 0 : index
    %1 = vector.load %arg2[%c0_2, %c0_3, %c0_4] : memref<4x8x32xf32, #tpu.memory_space<vmem>>, vector<4x8x32xf32>
    %c0_5 = arith.constant 0 : index
    %c0_6 = arith.constant 0 : index
    %c0_7 = arith.constant 0 : index
    %2 = vector.load %arg3[%c0_5, %c0_6, %c0_7] : memref<4x8x32xf32, #tpu.memory_space<vmem>>, vector<4x8x32xf32>
    %c0_8 = arith.constant 0 : index
    %c0_9 = arith.constant 0 : index
    %3 = vector.load %arg4[%c0_8, %c0_9] : memref<16x32xf32, #tpu.memory_space<vmem>>, vector<16x32xf32>
    %c0_10 = arith.constant 0 : index
    %c0_11 = arith.constant 0 : index
    %4 = vector.load %arg5[%c0_10, %c0_11] : memref<1x32xf32, #tpu.memory_space<vmem>>, vector<1x32xf32>
    %5 = vector.shape_cast %0 : vector<4x8x16xf32> to vector<32x16xf32>
    %cst = arith.constant dense<0.000000e+00> : vector<32x32xf32>
    %6 = tpu.matmul %5, %3, %cst {dimension_numbers = #tpu.dot_dimension_numbers<[1], [0], [0], [1], [0, 0, 1, 1], [], []>} : vector<32x16xf32>, vector<16x32xf32>, vector<32x32xf32> -> vector<32x32xf32>
    %7 = vector.broadcast %4 : vector<1x32xf32> to vector<32x32xf32>
    %8 = arith.addf %6, %7 : vector<32x32xf32>
    %cst_12 = arith.constant 0.000000e+00 : f32
    %9 = vector.broadcast %cst_12 : f32 to vector<32x32xf32>
    %10 = arith.cmpf oge, %8, %9 : vector<32x32xf32>
    %cst_13 = arith.constant 0.00999999977 : f32
    %11 = vector.broadcast %cst_13 : f32 to vector<32x32xf32>
    %12 = arith.mulf %11, %8 : vector<32x32xf32>
    %13 = arith.select %10, %8, %12 : vector<32x32xi1>, vector<32x32xf32>
    %14 = vector.shape_cast %13 : vector<32x32xf32> to vector<4x8x32xf32>
    %15 = arith.addf %1, %14 : vector<4x8x32xf32>
    %cst_14 = arith.constant 5.000000e-01 : f32
    %16 = vector.broadcast %cst_14 : f32 to vector<4x8x32xf32>
    %17 = arith.mulf %15, %16 : vector<4x8x32xf32>
    "tpu.trace_start"() <{level = 10 : i32, message = "ptd,psd->pts"}> : () -> ()
    %cst_15 = arith.constant dense<0.000000e+00> : vector<4x8x8xf32>
    %18 = tpu.matmul %17, %2, %cst_15 {dimension_numbers = #tpu.dot_dimension_numbers<[2], [2], [1], [1], [0, 0, 0, 1, 1, 1], [0], [0]>} : vector<4x8x32xf32>, vector<4x8x32xf32>, vector<4x8x8xf32> -> vector<4x8x8xf32>
    "tpu.trace_stop"() : () -> ()
    %cst_16 = arith.constant dense<0xFF800000> : vector<4x8xf32>
    %19 = vector.multi_reduction <maximumf>, %18, %cst_16 [2] : vector<4x8x8xf32> to vector<4x8xf32>
    %20 = vector.shape_cast %19 : vector<4x8xf32> to vector<4x8x1xf32>
    %21 = vector.broadcast %20 : vector<4x8x1xf32> to vector<4x8x8xf32>
    %22 = arith.subf %18, %21 : vector<4x8x8xf32>
    %23 = math.exp %22 : vector<4x8x8xf32>
    %cst_17 = arith.constant dense<0.000000e+00> : vector<4x8xf32>
    %24 = vector.multi_reduction <add>, %23, %cst_17 [2] : vector<4x8x8xf32> to vector<4x8xf32>
    %25 = vector.shape_cast %24 : vector<4x8xf32> to vector<4x8x1xf32>
    %26 = tpu.reciprocal %25 {approx = true} : vector<4x8x1xf32> -> vector<4x8x1xf32>
    %27 = vector.broadcast %26 : vector<4x8x1xf32> to vector<4x8x8xf32>
    %28 = arith.mulf %23, %27 : vector<4x8x8xf32>
    "tpu.trace_start"() <{level = 10 : i32, message = "pts,psd->ptd"}> : () -> ()
    %cst_18 = arith.constant dense<0.000000e+00> : vector<4x8x32xf32>
    %29 = tpu.matmul %28, %2, %cst_18 {dimension_numbers = #tpu.dot_dimension_numbers<[2], [1], [1], [2], [0, 0, 0, 1, 1, 2], [0], [0]>} : vector<4x8x8xf32>, vector<4x8x32xf32>, vector<4x8x32xf32> -> vector<4x8x32xf32>
    "tpu.trace_stop"() : () -> ()
    %30 = arith.addf %14, %29 : vector<4x8x32xf32>
    %cst_19 = arith.constant 5.000000e-01 : f32
    %31 = vector.broadcast %cst_19 : f32 to vector<4x8x32xf32>
    %32 = arith.mulf %30, %31 : vector<4x8x32xf32>
    %c0_20 = arith.constant 0 : index
    %c0_21 = arith.constant 0 : index
    %c0_22 = arith.constant 0 : index
    %33 = vector.load %arg6[%c0_20, %c0_21, %c0_22] : memref<4x8x32xf32, #tpu.memory_space<vmem>>, vector<4x8x32xf32>
    tpu.vector_store %arg6[%c0_20, %c0_21, %c0_22], %32 {strides = array<i32>} : memref<4x8x32xf32, #tpu.memory_space<vmem>>, vector<4x8x32xf32>,
    %c0_23 = arith.constant 0 : index
    %c0_24 = arith.constant 0 : index
    %c0_25 = arith.constant 0 : index
    %34 = vector.load %arg7[%c0_23, %c0_24, %c0_25] : memref<4x8x8xf32, #tpu.memory_space<vmem>>, vector<4x8x8xf32>
    tpu.vector_store %arg7[%c0_23, %c0_24, %c0_25], %28 {strides = array<i32>} : memref<4x8x8xf32, #tpu.memory_space<vmem>>, vector<4x8x8xf32>,
    return
  }
  func.func @transform_0(%arg0: i32) -> (i32, i32, i32) {
    %c0_i32 = arith.constant 0 : i32
    %c0_i32_0 = arith.constant 0 : i32
    %c0_i32_1 = arith.constant 0 : i32
    return %arg0, %c0_i32, %c0_i32_0 : i32, i32, i32
  }
  func.func @transform_1(%arg0: i32) -> (i32, i32, i32) {
    %c0_i32 = arith.constant 0 : i32
    %c0_i32_0 = arith.constant 0 : i32
    %c0_i32_1 = arith.constant 0 : i32
    return %arg0, %c0_i32, %c0_i32_0 : i32, i32, i32
  }
  func.func @transform_2(%arg0: i32) -> (i32, i32, i32) {
    %c0_i32 = arith.constant 0 : i32
    %c0_i32_0 = arith.constant 0 : i32
    %c0_i32_1 = arith.constant 0 : i32
    return %arg0, %c0_i32, %c0_i32_0 : i32, i32, i32
  }
  func.func @transform_3(%arg0: i32) -> (i32, i32) {
    %c0_i32 = arith.constant 0 : i32
    %c0_i32_0 = arith.constant 0 : i32
    %c0_i32_1 = arith.constant 0 : i32
    return %c0_i32, %c0_i32_0 : i32, i32
  }
  func.func @transform_4(%arg0: i32) -> (i32, i32) {
    %c0_i32 = arith.constant 0 : i32
    %c0_i32_0 = arith.constant 0 : i32
    %c0_i32_1 = arith.constant 0 : i32
    return %c0_i32, %c0_i32_0 : i32, i32
  }
  func.func @transform_5(%arg0: i32) -> (i32, i32, i32) {
    %c0_i32 = arith.constant 0 : i32
    %c0_i32_0 = arith.constant 0 : i32
    %c0_i32_1 = arith.constant 0 : i32
    return %arg0, %c0_i32, %c0_i32_0 : i32, i32, i32
  }
  func.func @transform_6(%arg0: i32) -> (i32, i32, i32) {
    %c0_i32 = arith.constant 0 : i32
    %c0_i32_0 = arith.constant 0 : i32
    %c0_i32_1 = arith.constant 0 : i32
    return %arg0, %c0_i32, %c0_i32_0 : i32, i32, i32
  }
}

</mosaic_0001>

<llo_original>
// kernel: tpu_custom_call.1
$region0: #{tpu_custom_call.1}
  #allocation0 [shape = 'u32[]', space=smem, size = 0x4, offset = 0x4, fixed_abs, tag = 'smem constant byte address 0x4 - core index']
  #allocation1 [shape = 'u32[144,128]{1,0:T(1,128)}', space=vmem, size = 0x12000, scoped, tag = 'internal scratch']
  %s0 = inlined_call_operand.hbm [shape: f32[8,8,16], index: 0, kind: input, shape index: {}]
  %s1 = inlined_call_operand.hbm [shape: f32[8,8,32], index: 1, kind: input, shape index: {}]
  %s2 = inlined_call_operand.hbm [shape: f32[8,8,32], index: 2, kind: input, shape index: {}]
  %s3 = inlined_call_operand.hbm [shape: f32[16,32], index: 3, kind: input, shape index: {}]
  %s4 = inlined_call_operand.vmem [shape: f32[1,32], index: 4, kind: input, shape index: {}]
  %s5 = inlined_call_operand.hbm [shape: f32[8,8,32], index: 5, kind: output, shape index: {0}]
  %s6 = inlined_call_operand.hbm [shape: f32[8,8,8], index: 6, kind: output, shape index: {1}]
  %7 = xla_tuple %s5, %s6
  %s8 = sld [smem:[#allocation0]]
  $region77: #{tpu_custom_call.1} parent=0
    _
  %s10 = ssub.s32 1, %s8
  %s11 = scalar_select 0, %s10, %s8
  $region1: #{tpu_custom_call.1} parent=0
    #allocation2 [shape = 'u8[32768]{0}', space=vmem, size = 0x8000, scoped, tag = 'input window, operand 0']
    #allocation3 [shape = 's32[2]{0}', space=sflag, size = 0x8, scoped, tag = 'scoped memory for tpu_custom_call.1']
    #allocation4 [shape = 's32[2]{0}', space=sflag, size = 0x8, scoped, tag = 'scoped memory for tpu_custom_call.1']
    #allocation5 [shape = 'u8[32768]{0}', space=vmem, size = 0x8000, scoped, tag = 'input window, operand 1']
    #allocation6 [shape = 's32[2]{0}', space=sflag, size = 0x8, scoped, tag = 'scoped memory for tpu_custom_call.1']
    #allocation7 [shape = 'u8[32768]{0}', space=vmem, size = 0x8000, scoped, tag = 'input window, operand 2']
    #allocation8 [shape = 'u8[8192]{0}', space=vmem, size = 0x2000, scoped, tag = 'input window, operand 3, single buffered']
    #allocation9 [shape = 's32[1]{0}', space=sflag, size = 0x4, scoped, tag = 'scoped memory for tpu_custom_call.1']
    #allocation10 [shape = 'u8[32768]{0}', space=vmem, size = 0x8000, scoped, tag = 'output window, operand 0']
    #allocation11 [shape = 'u8[32768]{0}', space=vmem, size = 0x8000, scoped, tag = 'output window, operand 1']
    #allocation12 [shape = 's32[2]{0}', space=sflag, size = 0x8, scoped, tag = 'scoped memory for tpu_custom_call.1']
    %12 = vsyncpa [#allocation3], 0
    %s13 = scalar_lea.sflag [#allocation3], 1
    %14 = vsyncpa %s13, 0
    %15 = vsyncpa [#allocation6], 0
    %s16 = scalar_lea.sflag [#allocation6], 1
    %17 = vsyncpa %s16, 0
    %18 = vsyncpa [#allocation9], 0
    %19 = vsyncpa [#allocation4], 0
    %s20 = scalar_lea.sflag [#allocation4], 1
    %21 = vsyncpa %s20, 0
    %22 = vsyncpa [#allocation12], 0
    %s23 = scalar_lea.sflag [#allocation12], 1
    %24 = vsyncpa %s23, 0
    loop: start=0, step=1, limit=4
    $region2: #{tpu_custom_call.1} parent=1 // loop_pre_header
      _
    $region3: #{tpu_custom_call.1} parent=1 // loop_header
      %s26 = sphi 0, %s30
      %p27 = scmp.ge.s32.totalorder %s26, 4
      %s36 = sphi 0, %s38
      %s39 = sphi 0, %s36
      %s40 = sphi 0, %s39
      %s56 = sphi 0, %s40
      %s62 = sphi 0, %s64
      %s65 = sphi 0, %s62
      %s66 = sphi 0, %s65
      %s82 = sphi 0, %s66
      %s88 = sphi 0, %s90
      %s91 = sphi 0, %s88
      %s92 = sphi 0, %s91
      %s108 = sphi 0, %s92
      %s112 = sphi 0, %s112
      %s114 = sphi 0, %s112
      %s115 = sphi 0, %s114
      %s129 = sphi 0, %s115
      %s133 = sphi 0, %s133
      %s135 = sphi 0, %s133
      %s136 = sphi 0, %s135
      %s150 = sphi 0, %s136
      %s156 = sphi 0, %s158
      %s159 = sphi 0, %s156
      %s160 = sphi 0, %s159
      %s176 = sphi 0, %s160
      %s182 = sphi 0, %s184
      %s185 = sphi 0, %s182
      %s186 = sphi 0, %s185
      %s202 = sphi 0, %s186
    $region4: #{tpu_custom_call.1} parent=1 // loop_header_branch
      %29 = sbr.rel (%p27) target = $region8
    $region5: #{tpu_custom_call.1} parent=1 // loop_body
      %s31 = ssub.s32 %s26, 1
      %s32 = ssub.s32 %s26, 2
      %s33 = sadd.s32 %s26, 1
      %s34 = ssub.s32 %s26, %s33
      %p35 = scmp.eq.s32.totalorder %s34, 0
      %s37 = sadd.s32 %s36, 1
      %s38 = scalar_select %p35, %s36, %s37
      %p41 = pneg %p35
      %p42 = scmp.eq.s32.totalorder %s26, 1
      %p43 = por %p41, %p42
      %p44 = scmp.ne.s32.totalorder %s36, %s39
      %p45 = scmp.eq.s32.totalorder %s26, 0
      %p46 = por %p44, %p45
      %p47 = scmp.ne.s32.totalorder %s36, %s39
      %p48 = scmp.eq.s32.totalorder %s31, 1
      %p49 = por %p47, %p48
      %p50 = scmp.ne.s32.totalorder %s39, %s40
      %p51 = scmp.eq.s32.totalorder %s31, 0
      %p52 = por %p50, %p51
      %p53 = scmp.ne.s32.totalorder %s39, %s40
      %p54 = scmp.eq.s32.totalorder %s32, 1
      %p55 = por %p53, %p54
      %p57 = scmp.ne.s32.totalorder %s40, %s56
      %p58 = scmp.eq.s32.totalorder %s32, 0
      %p59 = por %p57, %p58
      %s60 = ssub.s32 %s26, %s33
      %p61 = scmp.eq.s32.totalorder %s60, 0
      %s63 = sadd.s32 %s62, 1
      %s64 = scalar_select %p61, %s62, %s63
      %p67 = pneg %p61
      %p68 = scmp.eq.s32.totalorder %s26, 1
      %p69 = por %p67, %p68
      %p70 = scmp.ne.s32.totalorder %s62, %s65
      %p71 = scmp.eq.s32.totalorder %s26, 0
      %p72 = por %p70, %p71
      %p73 = scmp.ne.s32.totalorder %s62, %s65
      %p74 = scmp.eq.s32.totalorder %s31, 1
      %p75 = por %p73, %p74
      %p76 = scmp.ne.s32.totalorder %s65, %s66
      %p77 = scmp.eq.s32.totalorder %s31, 0
      %p78 = por %p76, %p77
      %p79 = scmp.ne.s32.totalorder %s65, %s66
      %p80 = scmp.eq.s32.totalorder %s32, 1
      %p81 = por %p79, %p80
      %p83 = scmp.ne.s32.totalorder %s66, %s82
      %p84 = scmp.eq.s32.totalorder %s32, 0
      %p85 = por %p83, %p84
      %s86 = ssub.s32 %s26, %s33
      %p87 = scmp.eq.s32.totalorder %s86, 0
      %s89 = sadd.s32 %s88, 1
      %s90 = scalar_select %p87, %s88, %s89
      %p93 = pneg %p87
      %p94 = scmp.eq.s32.totalorder %s26, 1
      %p95 = por %p93, %p94
      %p96 = scmp.ne.s32.totalorder %s88, %s91
      %p97 = scmp.eq.s32.totalorder %s26, 0
      %p98 = por %p96, %p97
      %p99 = scmp.ne.s32.totalorder %s88, %s91
      %p100 = scmp.eq.s32.totalorder %s31, 1
      %p101 = por %p99, %p100
      %p102 = scmp.ne.s32.totalorder %s91, %s92
      %p103 = scmp.eq.s32.totalorder %s31, 0
      %p104 = por %p102, %p103
      %p105 = scmp.ne.s32.totalorder %s91, %s92
      %p106 = scmp.eq.s32.totalorder %s32, 1
      %p107 = por %p105, %p106
      %p109 = scmp.ne.s32.totalorder %s92, %s108
      %p110 = scmp.eq.s32.totalorder %s32, 0
      %p111 = por %p109, %p110
      %s113 = sadd.s32 %s112, 1
      %p116 = scmp.eq.s32.totalorder %s26, 1
      %p117 = scmp.ne.s32.totalorder %s112, %s114
      %p118 = scmp.eq.s32.totalorder %s26, 0
      %p119 = por %p117, %p118
      %p120 = scmp.ne.s32.totalorder %s112, %s114
      %p121 = scmp.eq.s32.totalorder %s31, 1
      %p122 = por %p120, %p121
      %p123 = scmp.ne.s32.totalorder %s114, %s115
      %p124 = scmp.eq.s32.totalorder %s31, 0
      %p125 = por %p123, %p124
      %p126 = scmp.ne.s32.totalorder %s114, %s115
      %p127 = scmp.eq.s32.totalorder %s32, 1
      %p128 = por %p126, %p127
      %p130 = scmp.ne.s32.totalorder %s115, %s129
      %p131 = scmp.eq.s32.totalorder %s32, 0
      %p132 = por %p130, %p131
      %s134 = sadd.s32 %s133, 1
      %p137 = scmp.eq.s32.totalorder %s26, 1
      %p138 = scmp.ne.s32.totalorder %s133, %s135
      %p139 = scmp.eq.s32.totalorder %s26, 0
      %p140 = por %p138, %p139
      %p141 = scmp.ne.s32.totalorder %s133, %s135
      %p142 = scmp.eq.s32.totalorder %s31, 1
      %p143 = por %p141, %p142
      %p144 = scmp.ne.s32.totalorder %s135, %s136
      %p145 = scmp.eq.s32.totalorder %s31, 0
      %p146 = por %p144, %p145
      %p147 = scmp.ne.s32.totalorder %s135, %s136
      %p148 = scmp.eq.s32.totalorder %s32, 1
      %p149 = por %p147, %p148
      %p151 = scmp.ne.s32.totalorder %s136, %s150
      %p152 = scmp.eq.s32.totalorder %s32, 0
      %p153 = por %p151, %p152
      %s154 = ssub.s32 %s26, %s33
      %p155 = scmp.eq.s32.totalorder %s154, 0
      %s157 = sadd.s32 %s156, 1
      %s158 = scalar_select %p155, %s156, %s157
      %p161 = pneg %p155
      %p162 = scmp.eq.s32.totalorder %s26, 1
      %p163 = por %p161, %p162
      %p164 = scmp.ne.s32.totalorder %s156, %s159
      %p165 = scmp.eq.s32.totalorder %s26, 0
      %p166 = por %p164, %p165
      %p167 = scmp.ne.s32.totalorder %s156, %s159
      %p168 = scmp.eq.s32.totalorder %s31, 1
      %p169 = por %p167, %p168
      %p170 = scmp.ne.s32.totalorder %s159, %s160
      %p171 = scmp.eq.s32.totalorder %s31, 0
      %p172 = por %p170, %p171
      %p173 = scmp.ne.s32.totalorder %s159, %s160
      %p174 = scmp.eq.s32.totalorder %s32, 1
      %p175 = por %p173, %p174
      %p177 = scmp.ne.s32.totalorder %s160, %s176
      %p178 = scmp.eq.s32.totalorder %s32, 0
      %p179 = por %p177, %p178
      %s180 = ssub.s32 %s26, %s33
      %p181 = scmp.eq.s32.totalorder %s180, 0
      %s183 = sadd.s32 %s182, 1
      %s184 = scalar_select %p181, %s182, %s183
      %p187 = pneg %p181
      %p188 = scmp.eq.s32.totalorder %s26, 1
      %p189 = por %p187, %p188
      %p190 = scmp.ne.s32.totalorder %s182, %s185
      %p191 = scmp.eq.s32.totalorder %s26, 0
      %p192 = por %p190, %p191
      %p193 = scmp.ne.s32.totalorder %s182, %s185
      %p194 = scmp.eq.s32.totalorder %s31, 1
      %p195 = por %p193, %p194
      %p196 = scmp.ne.s32.totalorder %s185, %s186
      %p197 = scmp.eq.s32.totalorder %s31, 0
      %p198 = por %p196, %p197
      %p199 = scmp.ne.s32.totalorder %s185, %s186
      %p200 = scmp.eq.s32.totalorder %s32, 1
      %p201 = por %p199, %p200
      %p203 = scmp.ne.s32.totalorder %s186, %s202
      %p204 = scmp.eq.s32.totalorder %s32, 0
      %p205 = por %p203, %p204
      %p206 = scmp.le.s32.totalorder 1, %s26
      %p207 = scmp.lt.s32.totalorder %s26, 3
      %p208 = pnand %p206, %p207
      %p209 = pneg %p208
      // Predicated region
      $region9: #{tpu_custom_call.1} parent=5 // pred_check
        _
      $region10: #{tpu_custom_call.1} parent=5 // pred_check_branch
        %211 = sbr.rel (%p208) target = $region12
      $region11: #{tpu_custom_call.1} parent=5 // pred_region
        %s212 = ssub.s32 %s26, 1
        // Predicated region
        $region13: #{tpu_custom_call.1} parent=11 // pred_check
          %p213 = pneg %p125
        $region14: #{tpu_custom_call.1} parent=11 // pred_check_branch
          %215 = sbr.rel (%p213) target = $region16
        $region15: #{tpu_custom_call.1} parent=11 // pred_region
          %s217 = ssub.s32 256, 256
          %218 = vsyncadd [#allocation9], %s217
          %s219 = sshll.u32 [#allocation8], 4
          %s220 = int_to_ptr.vmem [resolvable:$true] %s219
          %225 = dma.hbm_to_vmem [thread:$0]  %s3, 256, %s220, [#allocation9], 128, 128, 8
        $region16: #{tpu_custom_call.1} parent=11 // pred_fallthru
          _
        // Predicated region
        $region17: #{tpu_custom_call.1} parent=11 // pred_check
          %p226 = pneg %p146
        $region18: #{tpu_custom_call.1} parent=11 // pred_check_branch
          %228 = sbr.rel (%p226) target = $region20
        $region19: #{tpu_custom_call.1} parent=11 // pred_region
          _
        $region20: #{tpu_custom_call.1} parent=11 // pred_fallthru
          _
      $region12: #{tpu_custom_call.1} parent=5 // pred_fallthru
        _
      %p229 = scmp.lt.s32.totalorder %s26, 2
      // Predicated region
      $region21: #{tpu_custom_call.1} parent=5 // pred_check
        %p230 = pneg %p229
      $region22: #{tpu_custom_call.1} parent=5 // pred_check_branch
        %232 = sbr.rel (%p230) target = $region24
      $region23: #{tpu_custom_call.1} parent=5 // pred_region
        // Predicated region
        $region25: #{tpu_custom_call.1} parent=23 // pred_check
          %p233 = pneg %p46
        $region26: #{tpu_custom_call.1} parent=23 // pred_check_branch
          %235 = sbr.rel (%p233) target = $region28
        $region27: #{tpu_custom_call.1} parent=23 // pred_region
          %s236 = sand.u32 %s36, 1
          %s237 = scalar_lea.sflag [#allocation3], %s236
          %s238 = sand.u32 %s36, 1
          %s239 = smul.addr %s238, 32
          %s240 = scalar_lea.vmem [#allocation2], %s239
          %s241 = smul.u32 4, %s26
          %s243 = ssub.s32 512, 512
          %244 = vsyncadd %s237, %s243
          %s245 = smul.addr %s241, 128
          %s246 = scalar_lea.hbm %s0, %s245
          %s247 = sshll.u32 %s240, 4
          %s248 = int_to_ptr.vmem [resolvable:$true] %s247
          %253 = dma.hbm_to_vmem [thread:$0]  %s246, 512, %s248, %s237, 128, 128, 8
        $region28: #{tpu_custom_call.1} parent=23 // pred_fallthru
          _
        // Predicated region
        $region29: #{tpu_custom_call.1} parent=23 // pred_check
          %p254 = pneg %p72
        $region30: #{tpu_custom_call.1} parent=23 // pred_check_branch
          %256 = sbr.rel (%p254) target = $region32
        $region31: #{tpu_custom_call.1} parent=23 // pred_region
          %s257 = sand.u32 %s26, 1
          %s258 = scalar_lea.sflag [#allocation6], %s257
          %s259 = sand.u32 %s62, 1
          %s260 = smul.addr %s259, 32
          %s261 = scalar_lea.vmem [#allocation5], %s260
          %s262 = smul.u32 4, %s26
          %s264 = ssub.s32 512, 512
          %265 = vsyncadd %s258, %s264
          %s266 = smul.addr %s262, 128
          %s267 = scalar_lea.hbm %s1, %s266
          %s268 = sshll.u32 %s261, 4
          %s269 = int_to_ptr.vmem [resolvable:$true] %s268
          %274 = dma.hbm_to_vmem [thread:$0]  %s267, 512, %s269, %s258, 128, 128, 8
        $region32: #{tpu_custom_call.1} parent=23 // pred_fallthru
          _
        // Predicated region
        $region33: #{tpu_custom_call.1} parent=23 // pred_check
          %p275 = pneg %p98
        $region34: #{tpu_custom_call.1} parent=23 // pred_check_branch
          %277 = sbr.rel (%p275) target = $region36
        $region35: #{tpu_custom_call.1} parent=23 // pred_region
          %s278 = sand.u32 %s26, 1
          %s279 = scalar_lea.sflag [#allocation6], %s278
          %s280 = sand.u32 %s88, 1
          %s281 = smul.addr %s280, 32
          %s282 = scalar_lea.vmem [#allocation7], %s281
          %s283 = smul.u32 4, %s26
          %s285 = ssub.s32 512, 512
          %286 = vsyncadd %s279, %s285
          %s287 = smul.addr %s283, 128
          %s288 = scalar_lea.hbm %s2, %s287
          %s289 = sshll.u32 %s282, 4
          %s290 = int_to_ptr.vmem [resolvable:$true] %s289
          %295 = dma.hbm_to_vmem [thread:$0]  %s288, 512, %s290, %s279, 128, 128, 8
        $region36: #{tpu_custom_call.1} parent=23 // pred_fallthru
          _
      $region24: #{tpu_custom_call.1} parent=5 // pred_fallthru
        _
      %p296 = scmp.le.s32.totalorder 1, %s26
      %p297 = scmp.lt.s32.totalorder %s26, 3
      %p298 = pnand %p296, %p297
      %p299 = pneg %p298
      // Predicated region
      $region37: #{tpu_custom_call.1} parent=5 // pred_check
        _
      $region38: #{tpu_custom_call.1} parent=5 // pred_check_branch
        %301 = sbr.rel (%p298) target = $region40
      $region39: #{tpu_custom_call.1} parent=5 // pred_region
        %s302 = ssub.s32 %s26, 1
        %s303 = sand.u32 %s39, 1
        %s304 = scalar_lea.sflag [#allocation3], %s303
        %s305 = sand.u32 %s39, 1
        %s306 = smul.addr %s305, 32
        %s307 = scalar_lea.vmem [#allocation2], %s306
        // Predicated region
        $region41: #{tpu_custom_call.1} parent=39 // pred_check
          %p308 = pneg %p52
        $region42: #{tpu_custom_call.1} parent=39 // pred_check_branch
          %310 = sbr.rel (%p308) target = $region44
        $region43: #{tpu_custom_call.1} parent=39 // pred_region
          %311 = dma.done %s304, 512
        $region44: #{tpu_custom_call.1} parent=39 // pred_fallthru
          _
        %s312 = sand.u32 %s31, 1
        %s313 = scalar_lea.sflag [#allocation6], %s312
        %s314 = sand.u32 %s65, 1
        %s315 = smul.addr %s314, 32
        %s316 = scalar_lea.vmem [#allocation5], %s315
        // Predicated region
        $region45: #{tpu_custom_call.1} parent=39 // pred_check
          %p317 = pneg %p78
        $region46: #{tpu_custom_call.1} parent=39 // pred_check_branch
          %319 = sbr.rel (%p317) target = $region48
        $region47: #{tpu_custom_call.1} parent=39 // pred_region
          %320 = dma.done %s313, 512
        $region48: #{tpu_custom_call.1} parent=39 // pred_fallthru
          _
        %s321 = sand.u32 %s31, 1
        %s322 = scalar_lea.sflag [#allocation6], %s321
        %s323 = sand.u32 %s91, 1
        %s324 = smul.addr %s323, 32
        %s325 = scalar_lea.vmem [#allocation7], %s324
        // Predicated region
        $region49: #{tpu_custom_call.1} parent=39 // pred_check
          %p326 = pneg %p104
        $region50: #{tpu_custom_call.1} parent=39 // pred_check_branch
          %328 = sbr.rel (%p326) target = $region52
        $region51: #{tpu_custom_call.1} parent=39 // pred_region
          %329 = dma.done %s322, 512
        $region52: #{tpu_custom_call.1} parent=39 // pred_fallthru
          _
        // Predicated region
        $region53: #{tpu_custom_call.1} parent=39 // pred_check
          %p330 = pneg %p125
        $region54: #{tpu_custom_call.1} parent=39 // pred_check_branch
          %332 = sbr.rel (%p330) target = $region56
        $region55: #{tpu_custom_call.1} parent=39 // pred_region
          %333 = dma.done [#allocation9], 256
        $region56: #{tpu_custom_call.1} parent=39 // pred_fallthru
          _
        %s334 = sand.u32 %s39, 1
        %s335 = scalar_lea.sflag [#allocation3], %s334
        %s336 = sand.u32 %s39, 1
        %s337 = smul.addr %s336, 32
        %s338 = scalar_lea.vmem [#allocation2], %s337
        %p339 = pneg %p52
        %p340 = pneg %p49
        %s341 = sand.u32 %s31, 1
        %s342 = scalar_lea.sflag [#allocation6], %s341
        %s343 = sand.u32 %s65, 1
        %s344 = smul.addr %s343, 32
        %s345 = scalar_lea.vmem [#allocation5], %s344
        %p346 = pneg %p78
        %p347 = pneg %p75
        %s348 = sand.u32 %s31, 1
        %s349 = scalar_lea.sflag [#allocation6], %s348
        %s350 = sand.u32 %s91, 1
        %s351 = smul.addr %s350, 32
        %s352 = scalar_lea.vmem [#allocation7], %s351
        %p353 = pneg %p104
        %p354 = pneg %p101
        %p355 = pneg %p125
        %p356 = pneg %p122
        %p357 = pneg %p146
        %p358 = pneg %p143
        %p359 = pneg %p172
        %p360 = pneg %p169
        %s361 = sand.u32 %s159, 1
        %s362 = scalar_lea.sflag [#allocation4], %s361
        %s363 = sand.u32 %s159, 1
        %s364 = smul.addr %s363, 32
        %s365 = scalar_lea.vmem [#allocation10], %s364
        %p366 = pneg %p198
        %p367 = pneg %p195
        %s368 = sand.u32 %s185, 1
        %s369 = scalar_lea.sflag [#allocation12], %s368
        %s370 = sand.u32 %s185, 1
        %s371 = smul.addr %s370, 32
        %s372 = scalar_lea.vmem [#allocation11], %s371
        %s373 = smul.u32 4, %s31
        %s374 = smul.u32 4, %s31
        %s375 = smul.u32 4, %s31
        %s376 = smul.u32 4, %s31
        %s377 = smul.u32 4, %s31
        %v378 = vld [vmem:[%s307] sm:$0xff]
        %v379 = vld [vmem:[%s307 + $0x8] sm:$0xff]
        %v380 = vld [vmem:[%s307 + $0x10] sm:$0xff]
        %v381 = vld [vmem:[%s307 + $0x18] sm:$0xff]
        %v382 = vld [vmem:[%s316] sm:$0xff]
        %v383 = vld [vmem:[%s316 + $0x8] sm:$0xff]
        %v384 = vld [vmem:[%s316 + $0x10] sm:$0xff]
        %v385 = vld [vmem:[%s316 + $0x18] sm:$0xff]
        %v386 = vld [vmem:[%s325] sm:$0xff]
        %v387 = vld [vmem:[%s325 + $0x8] sm:$0xff]
        %v388 = vld [vmem:[%s325 + $0x10] sm:$0xff]
        %v389 = vld [vmem:[%s325 + $0x18] sm:$0xff]
        %v390 = vld [vmem:[#allocation8] sm:$0xff]
        %v391 = vld [vmem:[#allocation8 + $0x8] sm:$0xff]
        %v392 = vld [vmem:[%s4] sm:$0x1]
        %v394 = vlaneseq
        %v395 = vshrl.u32 %v394, 7
        %v396 = vsub.s32 0, %v395
        %v397 = vrot.slane %v392, %v396
        %vm399 = vcmask 130048
        %v401 = vsel %vm399, %v378, 0
        %v404 = vsel %vm399, %v379, 0
        %v407 = vsel %vm399, %v380, 0
        %v410 = vsel %vm399, %v381, 0
        %412 = vmatprep.subr.mxu0 0.0
        %413 = vmatpush1.msra.mxu0 %v390
        %414 = vmatprep.subr.mxu0 0.0
        %415 = vmatpush1.msra.mxu0 %v391
        %416 = vmatprep.subr.mxu0 0.0
        %417 = vmatpush1.msra.mxu0 0.0
        %418 = vmatprep.subr.mxu0 0.0
        %419 = vmatpush1.msra.mxu0 0.0
        %420 = vmatprep.subr.mxu0 0.0
        %421 = vmatpush1.msra.mxu0 0.0
        %422 = vmatprep.subr.mxu0 0.0
        %423 = vmatpush1.msra.mxu0 0.0
        %424 = vmatprep.subr.mxu0 0.0
        %425 = vmatpush1.msra.mxu0 0.0
        %426 = vmatprep.subr.mxu0 0.0
        %427 = vmatpush1.msra.mxu0 0.0
        %428 = vmatprep.subr.mxu0 0.0
        %429 = vmatpush1.msra.mxu0 0.0
        %430 = vmatprep.subr.mxu0 0.0
        %431 = vmatpush1.msra.mxu0 0.0
        %432 = vmatprep.subr.mxu0 0.0
        %433 = vmatpush1.msra.mxu0 0.0
        %434 = vmatprep.subr.mxu0 0.0
        %435 = vmatpush1.msra.mxu0 0.0
        %436 = vmatprep.subr.mxu0 0.0
        %437 = vmatpush1.msra.mxu0 0.0
        %438 = vmatprep.subr.mxu0 0.0
        %439 = vmatpush1.msra.mxu0 0.0
        %440 = vmatprep.subr.mxu0 0.0
        %441 = vmatpush1.msra.mxu0 0.0
        %442 = vmatprep.subr.mxu0 0.0
        %443 = vmatpush1.msra.mxu0 0.0
        %444 = vmatprep.subr.mxu0 0.0
        %445 = vmatpush1.msra.mxu0 0.0
        %446 = vmatprep.subr.mxu0 0.0
        %447 = vmatpush1.msra.mxu0 0.0
        %448 = vmatprep.subr.mxu0 0.0
        %449 = vmatpush1.msra.mxu0 0.0
        %450 = vmatprep.subr.mxu0 0.0
        %451 = vmatpush1.msra.mxu0 0.0
        %452 = vmatprep.subr.mxu0 0.0
        %453 = vmatpush1.msra.mxu0 0.0
        %454 = vmatprep.subr.mxu0 0.0
        %455 = vmatpush1.msra.mxu0 0.0
        %456 = vmatprep.subr.mxu0 0.0
        %457 = vmatpush1.msra.mxu0 0.0
        %458 = vmatprep.subr.mxu0 0.0
        %459 = vmatpush1.msra.mxu0 0.0
        %460 = vmatprep.subr.mxu0 0.0
        %461 = vmatpush1.msra.mxu0 0.0
        %462 = vmatprep.subr.mxu0 0.0
        %463 = vmatpush1.msra.mxu0 0.0
        %464 = vmatprep.subr.mxu0 0.0
        %465 = vmatpush1.msra.mxu0 0.0
        %466 = vmatprep.subr.mxu0 0.0
        %467 = vmatpush1.msra.mxu0 0.0
        %468 = vmatprep.subr.mxu0 0.0
        %469 = vmatpush1.msra.mxu0 0.0
        %470 = vmatprep.subr.mxu0 0.0
        %471 = vmatpush1.msra.mxu0 0.0
        %472 = vmatprep.subr.mxu0 0.0
        %473 = vmatpush1.msra.mxu0 0.0
        %474 = vmatprep.subr.mxu0 0.0
        %475 = vmatpush1.msra.mxu0 0.0
        %476 = vmatprep.mubr.f32.mxu0 0.0
        %477 = vmatmul.mubr.f32.gmra.mrb[0].mxu0 %v401
        %v478 = vpop.f32.mrb[0].mxu0
        %v479 = vadd.f32 %v397, %v478
        %v480 = vpop.f32.mrb[0].mxu0
        %481 = vmatprep.mubr.f32.mxu0 0.0
        %482 = vmatmul.mubr.f32.gmra.mrb[0].mxu0 %v404
        %v483 = vpop.f32.mrb[0].mxu0
        %v484 = vadd.f32 %v397, %v483
        %v485 = vpop.f32.mrb[0].mxu0
        %486 = vmatprep.mubr.f32.mxu0 0.0
        %487 = vmatmul.mubr.f32.gmra.mrb[0].mxu0 %v407
        %v488 = vpop.f32.mrb[0].mxu0
        %v489 = vadd.f32 %v397, %v488
        %v490 = vpop.f32.mrb[0].mxu0
        %491 = vmatprep.mubr.f32.mxu0 0.0
        %492 = vmatmul.mubr.f32.gmra.mrb[0].mxu0 %v410
        %v493 = vpop.f32.mrb[0].mxu0
        %v494 = vadd.f32 %v397, %v493
        %v495 = vpop.f32.mrb[0].mxu0
        %496 = vdwg.mxu0
        %vm497 = vcmp.ge.f32.partialorder %v479, 0.0
        %vm498 = vcmp.ge.f32.partialorder %v484, 0.0
        %vm499 = vcmp.ge.f32.partialorder %v489, 0.0
        %vm500 = vcmp.ge.f32.partialorder %v494, 0.0
        %v501 = vmul.f32 %v479, 0.01
        %v502 = vmul.f32 %v484, 0.01
        %v503 = vmul.f32 %v489, 0.01
        %v504 = vmul.f32 %v494, 0.01
        %v505 = vsel %vm497, %v479, %v501
        %v506 = vsel %vm498, %v484, %v502
        %v507 = vsel %vm499, %v489, %v503
        %v508 = vsel %vm500, %v494, %v504
        %v509 = vadd.f32 %v382, %v505
        %v510 = vadd.f32 %v383, %v506
        %v511 = vadd.f32 %v384, %v507
        %v512 = vadd.f32 %v385, %v508
        %v513 = vmul.f32 %v509, 0.5
        %v514 = vmul.f32 %v510, 0.5
        %v515 = vmul.f32 %v511, 0.5
        %v516 = vmul.f32 %v512, 0.5
        %vm517 = vcmask 261120
        %v519 = vsel %vm517, %v513, 0
        %v522 = vsel %vm517, %v386, 0
        %524 = vmatprep.subr.mxu0 0.0
        %525 = vmatpush1.xpose.msra.mxu0 %v522
        %526 = vmatprep.subr.mxu0 0.0
        %527 = vmatpush1.xpose.msra.mxu0 0.0
        %528 = vmatprep.subr.mxu0 0.0
        %529 = vmatpush1.xpose.msra.mxu0 0.0
        %530 = vmatprep.subr.mxu0 0.0
        %531 = vmatpush1.xpose.msra.mxu0 0.0
        %532 = vmatprep.subr.mxu0 0.0
        %533 = vmatpush1.xpose.msra.mxu0 0.0
        %534 = vmatprep.subr.mxu0 0.0
        %535 = vmatpush1.xpose.msra.mxu0 0.0
        %536 = vmatprep.subr.mxu0 0.0
        %537 = vmatpush1.xpose.msra.mxu0 0.0
        %538 = vmatprep.subr.mxu0 0.0
        %539 = vmatpush1.xpose.msra.mxu0 0.0
        %540 = vmatprep.subr.mxu0 0.0
        %541 = vmatpush1.xpose.msra.mxu0 0.0
        %542 = vmatprep.subr.mxu0 0.0
        %543 = vmatpush1.xpose.msra.mxu0 0.0
        %544 = vmatprep.subr.mxu0 0.0
        %545 = vmatpush1.xpose.msra.mxu0 0.0
        %546 = vmatprep.subr.mxu0 0.0
        %547 = vmatpush1.xpose.msra.mxu0 0.0
        %548 = vmatprep.subr.mxu0 0.0
        %549 = vmatpush1.xpose.msra.mxu0 0.0
        %550 = vmatprep.subr.mxu0 0.0
        %551 = vmatpush1.xpose.msra.mxu0 0.0
        %552 = vmatprep.subr.mxu0 0.0
        %553 = vmatpush1.xpose.msra.mxu0 0.0
        %554 = vmatprep.subr.mxu0 0.0
        %555 = vmatpush1.xpose.msra.mxu0 0.0
        %556 = vmatprep.subr.mxu0 0.0
        %557 = vmatpush1.xpose.msra.mxu0 0.0
        %558 = vmatprep.subr.mxu0 0.0
        %559 = vmatpush1.xpose.msra.mxu0 0.0
        %560 = vmatprep.subr.mxu0 0.0
        %561 = vmatpush1.xpose.msra.mxu0 0.0
        %562 = vmatprep.subr.mxu0 0.0
        %563 = vmatpush1.xpose.msra.mxu0 0.0
        %564 = vmatprep.subr.mxu0 0.0
        %565 = vmatpush1.xpose.msra.mxu0 0.0
        %566 = vmatprep.subr.mxu0 0.0
        %567 = vmatpush1.xpose.msra.mxu0 0.0
        %568 = vmatprep.subr.mxu0 0.0
        %569 = vmatpush1.xpose.msra.mxu0 0.0
        %570 = vmatprep.subr.mxu0 0.0
        %571 = vmatpush1.xpose.msra.mxu0 0.0
        %572 = vmatprep.subr.mxu0 0.0
        %573 = vmatpush1.xpose.msra.mxu0 0.0
        %574 = vmatprep.subr.mxu0 0.0
        %575 = vmatpush1.xpose.msra.mxu0 0.0
        %576 = vmatprep.subr.mxu0 0.0
        %577 = vmatpush1.xpose.msra.mxu0 0.0
        %578 = vmatprep.subr.mxu0 0.0
        %579 = vmatpush1.xpose.msra.mxu0 0.0
        %580 = vmatprep.subr.mxu0 0.0
        %581 = vmatpush1.xpose.msra.mxu0 0.0
        %582 = vmatprep.subr.mxu0 0.0
        %583 = vmatpush1.xpose.msra.mxu0 0.0
        %584 = vmatprep.subr.mxu0 0.0
        %585 = vmatpush1.xpose.msra.mxu0 0.0
        %586 = vmatprep.subr.mxu0 0.0
        %587 = vmatpush1.xpose.msra.mxu0 0.0
        %588 = vmatprep.mubr.f32.mxu0 0.0
        %589 = vmatmul.mubr.f32.gmra.mrb[0].mxu0 %v519
        %v590 = vpop.f32.mrb[0].mxu0
        %v591 = vadd.f32 0.0, %v590
        %v592 = vpop.f32.mrb[0].mxu0
        %593 = vdwg.mxu0
        %v595 = vsel %vm517, %v514, 0
        %v598 = vsel %vm517, %v387, 0
        %600 = vmatprep.subr.mxu0 0.0
        %601 = vmatpush1.xpose.msra.mxu0 %v598
        %602 = vmatprep.subr.mxu0 0.0
        %603 = vmatpush1.xpose.msra.mxu0 0.0
        %604 = vmatprep.subr.mxu0 0.0
        %605 = vmatpush1.xpose.msra.mxu0 0.0
        %606 = vmatprep.subr.mxu0 0.0
        %607 = vmatpush1.xpose.msra.mxu0 0.0
        %608 = vmatprep.subr.mxu0 0.0
        %609 = vmatpush1.xpose.msra.mxu0 0.0
        %610 = vmatprep.subr.mxu0 0.0
        %611 = vmatpush1.xpose.msra.mxu0 0.0
        %612 = vmatprep.subr.mxu0 0.0
        %613 = vmatpush1.xpose.msra.mxu0 0.0
        %614 = vmatprep.subr.mxu0 0.0
        %615 = vmatpush1.xpose.msra.mxu0 0.0
        %616 = vmatprep.subr.mxu0 0.0
        %617 = vmatpush1.xpose.msra.mxu0 0.0
        %618 = vmatprep.subr.mxu0 0.0
        %619 = vmatpush1.xpose.msra.mxu0 0.0
        %620 = vmatprep.subr.mxu0 0.0
        %621 = vmatpush1.xpose.msra.mxu0 0.0
        %622 = vmatprep.subr.mxu0 0.0
        %623 = vmatpush1.xpose.msra.mxu0 0.0
        %624 = vmatprep.subr.mxu0 0.0
        %625 = vmatpush1.xpose.msra.mxu0 0.0
        %626 = vmatprep.subr.mxu0 0.0
        %627 = vmatpush1.xpose.msra.mxu0 0.0
        %628 = vmatprep.subr.mxu0 0.0
        %629 = vmatpush1.xpose.msra.mxu0 0.0
        %630 = vmatprep.subr.mxu0 0.0
        %631 = vmatpush1.xpose.msra.mxu0 0.0
        %632 = vmatprep.subr.mxu0 0.0
        %633 = vmatpush1.xpose.msra.mxu0 0.0
        %634 = vmatprep.subr.mxu0 0.0
        %635 = vmatpush1.xpose.msra.mxu0 0.0
        %636 = vmatprep.subr.mxu0 0.0
        %637 = vmatpush1.xpose.msra.mxu0 0.0
        %638 = vmatprep.subr.mxu0 0.0
        %639 = vmatpush1.xpose.msra.mxu0 0.0
        %640 = vmatprep.subr.mxu0 0.0
        %641 = vmatpush1.xpose.msra.mxu0 0.0
        %642 = vmatprep.subr.mxu0 0.0
        %643 = vmatpush1.xpose.msra.mxu0 0.0
        %644 = vmatprep.subr.mxu0 0.0
        %645 = vmatpush1.xpose.msra.mxu0 0.0
        %646 = vmatprep.subr.mxu0 0.0
        %647 = vmatpush1.xpose.msra.mxu0 0.0
        %648 = vmatprep.subr.mxu0 0.0
        %649 = vmatpush1.xpose.msra.mxu0 0.0
        %650 = vmatprep.subr.mxu0 0.0
        %651 = vmatpush1.xpose.msra.mxu0 0.0
        %652 = vmatprep.subr.mxu0 0.0
        %653 = vmatpush1.xpose.msra.mxu0 0.0
        %654 = vmatprep.subr.mxu0 0.0
        %655 = vmatpush1.xpose.msra.mxu0 0.0
        %656 = vmatprep.subr.mxu0 0.0
        %657 = vmatpush1.xpose.msra.mxu0 0.0
        %658 = vmatprep.subr.mxu0 0.0
        %659 = vmatpush1.xpose.msra.mxu0 0.0
        %660 = vmatprep.subr.mxu0 0.0
        %661 = vmatpush1.xpose.msra.mxu0 0.0
        %662 = vmatprep.subr.mxu0 0.0
        %663 = vmatpush1.xpose.msra.mxu0 0.0
        %664 = vmatprep.mubr.f32.mxu0 0.0
        %665 = vmatmul.mubr.f32.gmra.mrb[0].mxu0 %v595
        %v666 = vpop.f32.mrb[0].mxu0
        %v667 = vadd.f32 0.0, %v666
        %v668 = vpop.f32.mrb[0].mxu0
        %669 = vdwg.mxu0
        %v671 = vsel %vm517, %v515, 0
        %v674 = vsel %vm517, %v388, 0
        %676 = vmatprep.subr.mxu0 0.0
        %677 = vmatpush1.xpose.msra.mxu0 %v674
        %678 = vmatprep.subr.mxu0 0.0
        %679 = vmatpush1.xpose.msra.mxu0 0.0
        %680 = vmatprep.subr.mxu0 0.0
        %681 = vmatpush1.xpose.msra.mxu0 0.0
        %682 = vmatprep.subr.mxu0 0.0
        %683 = vmatpush1.xpose.msra.mxu0 0.0
        %684 = vmatprep.subr.mxu0 0.0
        %685 = vmatpush1.xpose.msra.mxu0 0.0
        %686 = vmatprep.subr.mxu0 0.0
        %687 = vmatpush1.xpose.msra.mxu0 0.0
        %688 = vmatprep.subr.mxu0 0.0
        %689 = vmatpush1.xpose.msra.mxu0 0.0
        %690 = vmatprep.subr.mxu0 0.0
        %691 = vmatpush1.xpose.msra.mxu0 0.0
        %692 = vmatprep.subr.mxu0 0.0
        %693 = vmatpush1.xpose.msra.mxu0 0.0
        %694 = vmatprep.subr.mxu0 0.0
        %695 = vmatpush1.xpose.msra.mxu0 0.0
        %696 = vmatprep.subr.mxu0 0.0
        %697 = vmatpush1.xpose.msra.mxu0 0.0
        %698 = vmatprep.subr.mxu0 0.0
        %699 = vmatpush1.xpose.msra.mxu0 0.0
        %700 = vmatprep.subr.mxu0 0.0
        %701 = vmatpush1.xpose.msra.mxu0 0.0
        %702 = vmatprep.subr.mxu0 0.0
        %703 = vmatpush1.xpose.msra.mxu0 0.0
        %704 = vmatprep.subr.mxu0 0.0
        %705 = vmatpush1.xpose.msra.mxu0 0.0
        %706 = vmatprep.subr.mxu0 0.0
        %707 = vmatpush1.xpose.msra.mxu0 0.0
        %708 = vmatprep.subr.mxu0 0.0
        %709 = vmatpush1.xpose.msra.mxu0 0.0
        %710 = vmatprep.subr.mxu0 0.0
        %711 = vmatpush1.xpose.msra.mxu0 0.0
        %712 = vmatprep.subr.mxu0 0.0
        %713 = vmatpush1.xpose.msra.mxu0 0.0
        %714 = vmatprep.subr.mxu0 0.0
        %715 = vmatpush1.xpose.msra.mxu0 0.0
        %716 = vmatprep.subr.mxu0 0.0
        %717 = vmatpush1.xpose.msra.mxu0 0.0
        %718 = vmatprep.subr.mxu0 0.0
        %719 = vmatpush1.xpose.msra.mxu0 0.0
        %720 = vmatprep.subr.mxu0 0.0
        %721 = vmatpush1.xpose.msra.mxu0 0.0
        %722 = vmatprep.subr.mxu0 0.0
        %723 = vmatpush1.xpose.msra.mxu0 0.0
        %724 = vmatprep.subr.mxu0 0.0
        %725 = vmatpush1.xpose.msra.mxu0 0.0
        %726 = vmatprep.subr.mxu0 0.0
        %727 = vmatpush1.xpose.msra.mxu0 0.0
        %728 = vmatprep.subr.mxu0 0.0
        %729 = vmatpush1.xpose.msra.mxu0 0.0
        %730 = vmatprep.subr.mxu0 0.0
        %731 = vmatpush1.xpose.msra.mxu0 0.0
        %732 = vmatprep.subr.mxu0 0.0
        %733 = vmatpush1.xpose.msra.mxu0 0.0
        %734 = vmatprep.subr.mxu0 0.0
        %735 = vmatpush1.xpose.msra.mxu0 0.0
        %736 = vmatprep.subr.mxu0 0.0
        %737 = vmatpush1.xpose.msra.mxu0 0.0
        %738 = vmatprep.subr.mxu0 0.0
        %739 = vmatpush1.xpose.msra.mxu0 0.0
        %740 = vmatprep.mubr.f32.mxu0 0.0
        %741 = vmatmul.mubr.f32.gmra.mrb[0].mxu0 %v671
        %v742 = vpop.f32.mrb[0].mxu0
        %v743 = vadd.f32 0.0, %v742
        %v744 = vpop.f32.mrb[0].mxu0
        %745 = vdwg.mxu0
        %v747 = vsel %vm517, %v516, 0
        %v750 = vsel %vm517, %v389, 0
        %752 = vmatprep.subr.mxu0 0.0
        %753 = vmatpush1.xpose.msra.mxu0 %v750
        %754 = vmatprep.subr.mxu0 0.0
        %755 = vmatpush1.xpose.msra.mxu0 0.0
        %756 = vmatprep.subr.mxu0 0.0
        %757 = vmatpush1.xpose.msra.mxu0 0.0
        %758 = vmatprep.subr.mxu0 0.0
        %759 = vmatpush1.xpose.msra.mxu0 0.0
        %760 = vmatprep.subr.mxu0 0.0
        %761 = vmatpush1.xpose.msra.mxu0 0.0
        %762 = vmatprep.subr.mxu0 0.0
        %763 = vmatpush1.xpose.msra.mxu0 0.0
        %764 = vmatprep.subr.mxu0 0.0
        %765 = vmatpush1.xpose.msra.mxu0 0.0
        %766 = vmatprep.subr.mxu0 0.0
        %767 = vmatpush1.xpose.msra.mxu0 0.0
        %768 = vmatprep.subr.mxu0 0.0
        %769 = vmatpush1.xpose.msra.mxu0 0.0
        %770 = vmatprep.subr.mxu0 0.0
        %771 = vmatpush1.xpose.msra.mxu0 0.0
        %772 = vmatprep.subr.mxu0 0.0
        %773 = vmatpush1.xpose.msra.mxu0 0.0
        %774 = vmatprep.subr.mxu0 0.0
        %775 = vmatpush1.xpose.msra.mxu0 0.0
        %776 = vmatprep.subr.mxu0 0.0
        %777 = vmatpush1.xpose.msra.mxu0 0.0
        %778 = vmatprep.subr.mxu0 0.0
        %779 = vmatpush1.xpose.msra.mxu0 0.0
        %780 = vmatprep.subr.mxu0 0.0
        %781 = vmatpush1.xpose.msra.mxu0 0.0
        %782 = vmatprep.subr.mxu0 0.0
        %783 = vmatpush1.xpose.msra.mxu0 0.0
        %784 = vmatprep.subr.mxu0 0.0
        %785 = vmatpush1.xpose.msra.mxu0 0.0
        %786 = vmatprep.subr.mxu0 0.0
        %787 = vmatpush1.xpose.msra.mxu0 0.0
        %788 = vmatprep.subr.mxu0 0.0
        %789 = vmatpush1.xpose.msra.mxu0 0.0
        %790 = vmatprep.subr.mxu0 0.0
        %791 = vmatpush1.xpose.msra.mxu0 0.0
        %792 = vmatprep.subr.mxu0 0.0
        %793 = vmatpush1.xpose.msra.mxu0 0.0
        %794 = vmatprep.subr.mxu0 0.0
        %795 = vmatpush1.xpose.msra.mxu0 0.0
        %796 = vmatprep.subr.mxu0 0.0
        %797 = vmatpush1.xpose.msra.mxu0 0.0
        %798 = vmatprep.subr.mxu0 0.0
        %799 = vmatpush1.xpose.msra.mxu0 0.0
        %800 = vmatprep.subr.mxu0 0.0
        %801 = vmatpush1.xpose.msra.mxu0 0.0
        %802 = vmatprep.subr.mxu0 0.0
        %803 = vmatpush1.xpose.msra.mxu0 0.0
        %804 = vmatprep.subr.mxu0 0.0
        %805 = vmatpush1.xpose.msra.mxu0 0.0
        %806 = vmatprep.subr.mxu0 0.0
        %807 = vmatpush1.xpose.msra.mxu0 0.0
        %808 = vmatprep.subr.mxu0 0.0
        %809 = vmatpush1.xpose.msra.mxu0 0.0
        %810 = vmatprep.subr.mxu0 0.0
        %811 = vmatpush1.xpose.msra.mxu0 0.0
        %812 = vmatprep.subr.mxu0 0.0
        %813 = vmatpush1.xpose.msra.mxu0 0.0
        %814 = vmatprep.subr.mxu0 0.0
        %815 = vmatpush1.xpose.msra.mxu0 0.0
        %816 = vmatprep.mubr.f32.mxu0 0.0
        %817 = vmatmul.mubr.f32.gmra.mrb[0].mxu0 %v747
        %v818 = vpop.f32.mrb[0].mxu0
        %v819 = vadd.f32 0.0, %v818
        %v820 = vpop.f32.mrb[0].mxu0
        %821 = vdwg.mxu0
        %vm822 = vcmask 64512
        %v823 = vsel %vm822, %v591, -inf
        %824 = vmax.xlane.f32.xlu0 %v823
        %v825 = vpop.xlane.xlu0 %824
        %v826 = vsel %vm822, %v667, -inf
        %827 = vmax.xlane.f32.xlu0 %v826
        %v828 = vpop.xlane.xlu0 %827
        %v829 = vsel %vm822, %v743, -inf
        %830 = vmax.xlane.f32.xlu0 %v829
        %v831 = vpop.xlane.xlu0 %830
        %v832 = vsel %vm822, %v819, -inf
        %833 = vmax.xlane.f32.xlu0 %v832
        %v834 = vpop.xlane.xlu0 %833
        %v835 = vsub.f32 %v591, %v825
        %v836 = vsub.f32 %v667, %v828
        %v837 = vsub.f32 %v743, %v831
        %v838 = vsub.f32 %v819, %v834
        %v839 = vmul.f32 %v835, 1.442695
        %v840 = vpow.pop %v839
        %v841 = vmul.f32 %v836, 1.442695
        %v842 = vpow.pop %v841
        %v843 = vmul.f32 %v837, 1.442695
        %v844 = vpow.pop %v843
        %v845 = vmul.f32 %v838, 1.442695
        %v846 = vpow.pop %v845
        %v847 = vsel %vm822, %v840, 0.0
        %848 = vadd.xlane.f32.xlu0 %v847
        %v849 = vpop.xlane.xlu0 %848
        %v850 = vsel %vm822, %v842, 0.0
        %851 = vadd.xlane.f32.xlu0 %v850
        %v852 = vpop.xlane.xlu0 %851
        %v853 = vsel %vm822, %v844, 0.0
        %854 = vadd.xlane.f32.xlu0 %v853
        %v855 = vpop.xlane.xlu0 %854
        %v856 = vsel %vm822, %v846, 0.0
        %857 = vadd.xlane.f32.xlu0 %v856
        %v858 = vpop.xlane.xlu0 %857
        %v859 = vrcp.pop %v849
        %v860 = vrcp.pop %v852
        %v861 = vrcp.pop %v855
        %v862 = vrcp.pop %v858
        %v863 = vmul.f32 %v840, %v859
        %v864 = vmul.f32 %v842, %v860
        %v865 = vmul.f32 %v844, %v861
        %v866 = vmul.f32 %v846, %v862
        %v868 = vsel %vm822, %v863, 0
        %870 = vmatprep.subr.mxu0 0.0
        %871 = vmatpush1.msra.mxu0 %v386
        %872 = vmatprep.subr.mxu0 0.0
        %873 = vmatpush1.msra.mxu0 0.0
        %874 = vmatprep.subr.mxu0 0.0
        %875 = vmatpush1.msra.mxu0 0.0
        %876 = vmatprep.subr.mxu0 0.0
        %877 = vmatpush1.msra.mxu0 0.0
        %878 = vmatprep.subr.mxu0 0.0
        %879 = vmatpush1.msra.mxu0 0.0
        %880 = vmatprep.subr.mxu0 0.0
        %881 = vmatpush1.msra.mxu0 0.0
        %882 = vmatprep.subr.mxu0 0.0
        %883 = vmatpush1.msra.mxu0 0.0
        %884 = vmatprep.subr.mxu0 0.0
        %885 = vmatpush1.msra.mxu0 0.0
        %886 = vmatprep.subr.mxu0 0.0
        %887 = vmatpush1.msra.mxu0 0.0
        %888 = vmatprep.subr.mxu0 0.0
        %889 = vmatpush1.msra.mxu0 0.0
        %890 = vmatprep.subr.mxu0 0.0
        %891 = vmatpush1.msra.mxu0 0.0
        %892 = vmatprep.subr.mxu0 0.0
        %893 = vmatpush1.msra.mxu0 0.0
        %894 = vmatprep.subr.mxu0 0.0
        %895 = vmatpush1.msra.mxu0 0.0
        %896 = vmatprep.subr.mxu0 0.0
        %897 = vmatpush1.msra.mxu0 0.0
        %898 = vmatprep.subr.mxu0 0.0
        %899 = vmatpush1.msra.mxu0 0.0
        %900 = vmatprep.subr.mxu0 0.0
        %901 = vmatpush1.msra.mxu0 0.0
        %902 = vmatprep.subr.mxu0 0.0
        %903 = vmatpush1.msra.mxu0 0.0
        %904 = vmatprep.subr.mxu0 0.0
        %905 = vmatpush1.msra.mxu0 0.0
        %906 = vmatprep.subr.mxu0 0.0
        %907 = vmatpush1.msra.mxu0 0.0
        %908 = vmatprep.subr.mxu0 0.0
        %909 = vmatpush1.msra.mxu0 0.0
        %910 = vmatprep.subr.mxu0 0.0
        %911 = vmatpush1.msra.mxu0 0.0
        %912 = vmatprep.subr.mxu0 0.0
        %913 = vmatpush1.msra.mxu0 0.0
        %914 = vmatprep.subr.mxu0 0.0
        %915 = vmatpush1.msra.mxu0 0.0
        %916 = vmatprep.subr.mxu0 0.0
        %917 = vmatpush1.msra.mxu0 0.0
        %918 = vmatprep.subr.mxu0 0.0
        %919 = vmatpush1.msra.mxu0 0.0
        %920 = vmatprep.subr.mxu0 0.0
        %921 = vmatpush1.msra.mxu0 0.0
        %922 = vmatprep.subr.mxu0 0.0
        %923 = vmatpush1.msra.mxu0 0.0
        %924 = vmatprep.subr.mxu0 0.0
        %925 = vmatpush1.msra.mxu0 0.0
        %926 = vmatprep.subr.mxu0 0.0
        %927 = vmatpush1.msra.mxu0 0.0
        %928 = vmatprep.subr.mxu0 0.0
        %929 = vmatpush1.msra.mxu0 0.0
        %930 = vmatprep.subr.mxu0 0.0
        %931 = vmatpush1.msra.mxu0 0.0
        %932 = vmatprep.subr.mxu0 0.0
        %933 = vmatpush1.msra.mxu0 0.0
        %934 = vmatprep.mubr.f32.mxu0 0.0
        %935 = vmatmul.mubr.f32.gmra.mrb[0].mxu0 %v868
        %v936 = vpop.f32.mrb[0].mxu0
        %v937 = vadd.f32 0.0, %v936
        %v938 = vpop.f32.mrb[0].mxu0
        %939 = vdwg.mxu0
        %v941 = vsel %vm822, %v864, 0
        %943 = vmatprep.subr.mxu0 0.0
        %944 = vmatpush1.msra.mxu0 %v387
        %945 = vmatprep.subr.mxu0 0.0
        %946 = vmatpush1.msra.mxu0 0.0
        %947 = vmatprep.subr.mxu0 0.0
        %948 = vmatpush1.msra.mxu0 0.0
        %949 = vmatprep.subr.mxu0 0.0
        %950 = vmatpush1.msra.mxu0 0.0
        %951 = vmatprep.subr.mxu0 0.0
        %952 = vmatpush1.msra.mxu0 0.0
        %953 = vmatprep.subr.mxu0 0.0
        %954 = vmatpush1.msra.mxu0 0.0
        %955 = vmatprep.subr.mxu0 0.0
        %956 = vmatpush1.msra.mxu0 0.0
        %957 = vmatprep.subr.mxu0 0.0
        %958 = vmatpush1.msra.mxu0 0.0
        %959 = vmatprep.subr.mxu0 0.0
        %960 = vmatpush1.msra.mxu0 0.0
        %961 = vmatprep.subr.mxu0 0.0
        %962 = vmatpush1.msra.mxu0 0.0
        %963 = vmatprep.subr.mxu0 0.0
        %964 = vmatpush1.msra.mxu0 0.0
        %965 = vmatprep.subr.mxu0 0.0
        %966 = vmatpush1.msra.mxu0 0.0
        %967 = vmatprep.subr.mxu0 0.0
        %968 = vmatpush1.msra.mxu0 0.0
        %969 = vmatprep.subr.mxu0 0.0
        %970 = vmatpush1.msra.mxu0 0.0
        %971 = vmatprep.subr.mxu0 0.0
        %972 = vmatpush1.msra.mxu0 0.0
        %973 = vmatprep.subr.mxu0 0.0
        %974 = vmatpush1.msra.mxu0 0.0
        %975 = vmatprep.subr.mxu0 0.0
        %976 = vmatpush1.msra.mxu0 0.0
        %977 = vmatprep.subr.mxu0 0.0
        %978 = vmatpush1.msra.mxu0 0.0
        %979 = vmatprep.subr.mxu0 0.0
        %980 = vmatpush1.msra.mxu0 0.0
        %981 = vmatprep.subr.mxu0 0.0
        %982 = vmatpush1.msra.mxu0 0.0
        %983 = vmatprep.subr.mxu0 0.0
        %984 = vmatpush1.msra.mxu0 0.0
        %985 = vmatprep.subr.mxu0 0.0
        %986 = vmatpush1.msra.mxu0 0.0
        %987 = vmatprep.subr.mxu0 0.0
        %988 = vmatpush1.msra.mxu0 0.0
        %989 = vmatprep.subr.mxu0 0.0
        %990 = vmatpush1.msra.mxu0 0.0
        %991 = vmatprep.subr.mxu0 0.0
        %992 = vmatpush1.msra.mxu0 0.0
        %993 = vmatprep.subr.mxu0 0.0
        %994 = vmatpush1.msra.mxu0 0.0
        %995 = vmatprep.subr.mxu0 0.0
        %996 = vmatpush1.msra.mxu0 0.0
        %997 = vmatprep.subr.mxu0 0.0
        %998 = vmatpush1.msra.mxu0 0.0
        %999 = vmatprep.subr.mxu0 0.0
        %1000 = vmatpush1.msra.mxu0 0.0
        %1001 = vmatprep.subr.mxu0 0.0
        %1002 = vmatpush1.msra.mxu0 0.0
        %1003 = vmatprep.subr.mxu0 0.0
        %1004 = vmatpush1.msra.mxu0 0.0
        %1005 = vmatprep.subr.mxu0 0.0
        %1006 = vmatpush1.msra.mxu0 0.0
        %1007 = vmatprep.mubr.f32.mxu0 0.0
        %1008 = vmatmul.mubr.f32.gmra.mrb[0].mxu0 %v941
        %v1009 = vpop.f32.mrb[0].mxu0
        %v1010 = vadd.f32 0.0, %v1009
        %v1011 = vpop.f32.mrb[0].mxu0
        %1012 = vdwg.mxu0
        %v1014 = vsel %vm822, %v865, 0
        %1016 = vmatprep.subr.mxu0 0.0
        %1017 = vmatpush1.msra.mxu0 %v388
        %1018 = vmatprep.subr.mxu0 0.0
        %1019 = vmatpush1.msra.mxu0 0.0
        %1020 = vmatprep.subr.mxu0 0.0
        %1021 = vmatpush1.msra.mxu0 0.0
        %1022 = vmatprep.subr.mxu0 0.0
        %1023 = vmatpush1.msra.mxu0 0.0
        %1024 = vmatprep.subr.mxu0 0.0
        %1025 = vmatpush1.msra.mxu0 0.0
        %1026 = vmatprep.subr.mxu0 0.0
        %1027 = vmatpush1.msra.mxu0 0.0
        %1028 = vmatprep.subr.mxu0 0.0
        %1029 = vmatpush1.msra.mxu0 0.0
        %1030 = vmatprep.subr.mxu0 0.0
        %1031 = vmatpush1.msra.mxu0 0.0
        %1032 = vmatprep.subr.mxu0 0.0
        %1033 = vmatpush1.msra.mxu0 0.0
        %1034 = vmatprep.subr.mxu0 0.0
        %1035 = vmatpush1.msra.mxu0 0.0
        %1036 = vmatprep.subr.mxu0 0.0
        %1037 = vmatpush1.msra.mxu0 0.0
        %1038 = vmatprep.subr.mxu0 0.0
        %1039 = vmatpush1.msra.mxu0 0.0
        %1040 = vmatprep.subr.mxu0 0.0
        %1041 = vmatpush1.msra.mxu0 0.0
        %1042 = vmatprep.subr.mxu0 0.0
        %1043 = vmatpush1.msra.mxu0 0.0
        %1044 = vmatprep.subr.mxu0 0.0
        %1045 = vmatpush1.msra.mxu0 0.0
        %1046 = vmatprep.subr.mxu0 0.0
        %1047 = vmatpush1.msra.mxu0 0.0
        %1048 = vmatprep.subr.mxu0 0.0
        %1049 = vmatpush1.msra.mxu0 0.0
        %1050 = vmatprep.subr.mxu0 0.0
        %1051 = vmatpush1.msra.mxu0 0.0
        %1052 = vmatprep.subr.mxu0 0.0
        %1053 = vmatpush1.msra.mxu0 0.0
        %1054 = vmatprep.subr.mxu0 0.0
        %1055 = vmatpush1.msra.mxu0 0.0
        %1056 = vmatprep.subr.mxu0 0.0
        %1057 = vmatpush1.msra.mxu0 0.0
        %1058 = vmatprep.subr.mxu0 0.0
        %1059 = vmatpush1.msra.mxu0 0.0
        %1060 = vmatprep.subr.mxu0 0.0
        %1061 = vmatpush1.msra.mxu0 0.0
        %1062 = vmatprep.subr.mxu0 0.0
        %1063 = vmatpush1.msra.mxu0 0.0
        %1064 = vmatprep.subr.mxu0 0.0
        %1065 = vmatpush1.msra.mxu0 0.0
        %1066 = vmatprep.subr.mxu0 0.0
        %1067 = vmatpush1.msra.mxu0 0.0
        %1068 = vmatprep.subr.mxu0 0.0
        %1069 = vmatpush1.msra.mxu0 0.0
        %1070 = vmatprep.subr.mxu0 0.0
        %1071 = vmatpush1.msra.mxu0 0.0
        %1072 = vmatprep.subr.mxu0 0.0
        %1073 = vmatpush1.msra.mxu0 0.0
        %1074 = vmatprep.subr.mxu0 0.0
        %1075 = vmatpush1.msra.mxu0 0.0
        %1076 = vmatprep.subr.mxu0 0.0
        %1077 = vmatpush1.msra.mxu0 0.0
        %1078 = vmatprep.subr.mxu0 0.0
        %1079 = vmatpush1.msra.mxu0 0.0
        %1080 = vmatprep.mubr.f32.mxu0 0.0
        %1081 = vmatmul.mubr.f32.gmra.mrb[0].mxu0 %v1014
        %v1082 = vpop.f32.mrb[0].mxu0
        %v1083 = vadd.f32 0.0, %v1082
        %v1084 = vpop.f32.mrb[0].mxu0
        %1085 = vdwg.mxu0
        %v1087 = vsel %vm822, %v866, 0
        %1089 = vmatprep.subr.mxu0 0.0
        %1090 = vmatpush1.msra.mxu0 %v389
        %1091 = vmatprep.subr.mxu0 0.0
        %1092 = vmatpush1.msra.mxu0 0.0
        %1093 = vmatprep.subr.mxu0 0.0
        %1094 = vmatpush1.msra.mxu0 0.0
        %1095 = vmatprep.subr.mxu0 0.0
        %1096 = vmatpush1.msra.mxu0 0.0
        %1097 = vmatprep.subr.mxu0 0.0
        %1098 = vmatpush1.msra.mxu0 0.0
        %1099 = vmatprep.subr.mxu0 0.0
        %1100 = vmatpush1.msra.mxu0 0.0
        %1101 = vmatprep.subr.mxu0 0.0
        %1102 = vmatpush1.msra.mxu0 0.0
        %1103 = vmatprep.subr.mxu0 0.0
        %1104 = vmatpush1.msra.mxu0 0.0
        %1105 = vmatprep.subr.mxu0 0.0
        %1106 = vmatpush1.msra.mxu0 0.0
        %1107 = vmatprep.subr.mxu0 0.0
        %1108 = vmatpush1.msra.mxu0 0.0
        %1109 = vmatprep.subr.mxu0 0.0
        %1110 = vmatpush1.msra.mxu0 0.0
        %1111 = vmatprep.subr.mxu0 0.0
        %1112 = vmatpush1.msra.mxu0 0.0
        %1113 = vmatprep.subr.mxu0 0.0
        %1114 = vmatpush1.msra.mxu0 0.0
        %1115 = vmatprep.subr.mxu0 0.0
        %1116 = vmatpush1.msra.mxu0 0.0
        %1117 = vmatprep.subr.mxu0 0.0
        %1118 = vmatpush1.msra.mxu0 0.0
        %1119 = vmatprep.subr.mxu0 0.0
        %1120 = vmatpush1.msra.mxu0 0.0
        %1121 = vmatprep.subr.mxu0 0.0
        %1122 = vmatpush1.msra.mxu0 0.0
        %1123 = vmatprep.subr.mxu0 0.0
        %1124 = vmatpush1.msra.mxu0 0.0
        %1125 = vmatprep.subr.mxu0 0.0
        %1126 = vmatpush1.msra.mxu0 0.0
        %1127 = vmatprep.subr.mxu0 0.0
        %1128 = vmatpush1.msra.mxu0 0.0
        %1129 = vmatprep.subr.mxu0 0.0
        %1130 = vmatpush1.msra.mxu0 0.0
        %1131 = vmatprep.subr.mxu0 0.0
        %1132 = vmatpush1.msra.mxu0 0.0
        %1133 = vmatprep.subr.mxu0 0.0
        %1134 = vmatpush1.msra.mxu0 0.0
        %1135 = vmatprep.subr.mxu0 0.0
        %1136 = vmatpush1.msra.mxu0 0.0
        %1137 = vmatprep.subr.mxu0 0.0
        %1138 = vmatpush1.msra.mxu0 0.0
        %1139 = vmatprep.subr.mxu0 0.0
        %1140 = vmatpush1.msra.mxu0 0.0
        %1141 = vmatprep.subr.mxu0 0.0
        %1142 = vmatpush1.msra.mxu0 0.0
        %1143 = vmatprep.subr.mxu0 0.0
        %1144 = vmatpush1.msra.mxu0 0.0
        %1145 = vmatprep.subr.mxu0 0.0
        %1146 = vmatpush1.msra.mxu0 0.0
        %1147 = vmatprep.subr.mxu0 0.0
        %1148 = vmatpush1.msra.mxu0 0.0
        %1149 = vmatprep.subr.mxu0 0.0
        %1150 = vmatpush1.msra.mxu0 0.0
        %1151 = vmatprep.subr.mxu0 0.0
        %1152 = vmatpush1.msra.mxu0 0.0
        %1153 = vmatprep.mubr.f32.mxu0 0.0
        %1154 = vmatmul.mubr.f32.gmra.mrb[0].mxu0 %v1087
        %v1155 = vpop.f32.mrb[0].mxu0
        %v1156 = vadd.f32 0.0, %v1155
        %v1157 = vpop.f32.mrb[0].mxu0
        %1158 = vdwg.mxu0
        %v1159 = vadd.f32 %v505, %v937
        %v1160 = vadd.f32 %v506, %v1010
        %v1161 = vadd.f32 %v507, %v1083
        %v1162 = vadd.f32 %v508, %v1156
        %v1163 = vmul.f32 %v1159, 0.5
        %v1164 = vmul.f32 %v1160, 0.5
        %v1165 = vmul.f32 %v1161, 0.5
        %v1166 = vmul.f32 %v1162, 0.5
        %1167 = vst.msk [vmem:[%s365] sm:$0xff] %vm517, %v1163
        %1168 = vst.msk [vmem:[%s365 + $0x8] sm:$0xff] %vm517, %v1164
        %1169 = vst.msk [vmem:[%s365 + $0x10] sm:$0xff] %vm517, %v1165
        %1170 = vst.msk [vmem:[%s365 + $0x18] sm:$0xff] %vm517, %v1166
        %1171 = vst.msk [vmem:[%s372] sm:$0xff] %vm822, %v863
        %1172 = vst.msk [vmem:[%s372 + $0x8] sm:$0xff] %vm822, %v864
        %1173 = vst.msk [vmem:[%s372 + $0x10] sm:$0xff] %vm822, %v865
        %1174 = vst.msk [vmem:[%s372 + $0x18] sm:$0xff] %vm822, %v866
        %s1175 = sand.u32 %s159, 1
        %s1176 = scalar_lea.sflag [#allocation4], %s1175
        %s1177 = sand.u32 %s159, 1
        %s1178 = smul.addr %s1177, 32
        %s1179 = scalar_lea.vmem [#allocation10], %s1178
        %s1180 = sand.u32 %s185, 1
        %s1181 = scalar_lea.sflag [#allocation12], %s1180
        %s1182 = sand.u32 %s185, 1
        %s1183 = smul.addr %s1182, 32
        %s1184 = scalar_lea.vmem [#allocation11], %s1183
        // Predicated region
        $region57: #{tpu_custom_call.1} parent=39 // pred_check
          %p1185 = pneg %p169
        $region58: #{tpu_custom_call.1} parent=39 // pred_check_branch
          %1187 = sbr.rel (%p1185) target = $region60
        $region59: #{tpu_custom_call.1} parent=39 // pred_region
          %s1188 = smul.u32 4, %s31
          %s1190 = ssub.s32 512, 512
          %1191 = vsyncadd %s1176, %s1190
          %s1192 = smul.addr %s1188, 128
          %s1193 = scalar_lea.hbm %s5, %s1192
          %s1194 = sshll.u32 %s1179, 4
          %s1195 = int_to_ptr.vmem [resolvable:$true] %s1194
          %1200 = dma.vmem_to_hbm [thread:$0]  %s1195, 512, %s1193, %s1176, 128, 128, 8
        $region60: #{tpu_custom_call.1} parent=39 // pred_fallthru
          _
        // Predicated region
        $region61: #{tpu_custom_call.1} parent=39 // pred_check
          %p1201 = pneg %p195
        $region62: #{tpu_custom_call.1} parent=39 // pred_check_branch
          %1203 = sbr.rel (%p1201) target = $region64
        $region63: #{tpu_custom_call.1} parent=39 // pred_region
          %s1204 = smul.u32 4, %s31
          %s1206 = ssub.s32 512, 512
          %1207 = vsyncadd %s1181, %s1206
          %s1208 = smul.addr %s1204, 128
          %s1209 = scalar_lea.hbm %s6, %s1208
          %s1210 = sshll.u32 %s1184, 4
          %s1211 = int_to_ptr.vmem [resolvable:$true] %s1210
          %1216 = dma.vmem_to_hbm [thread:$0]  %s1211, 512, %s1209, %s1181, 128, 128, 8
        $region64: #{tpu_custom_call.1} parent=39 // pred_fallthru
          _
      $region40: #{tpu_custom_call.1} parent=5 // pred_fallthru
        _
      %p1217 = scmp.le.s32.totalorder 2, %s26
      // Predicated region
      $region65: #{tpu_custom_call.1} parent=5 // pred_check
        %p1218 = pneg %p1217
      $region66: #{tpu_custom_call.1} parent=5 // pred_check_branch
        %1220 = sbr.rel (%p1218) target = $region68
      $region67: #{tpu_custom_call.1} parent=5 // pred_region
        %s1221 = ssub.s32 %s26, 2
        // Predicated region
        $region69: #{tpu_custom_call.1} parent=67 // pred_check
          %p1222 = pneg %p175
        $region70: #{tpu_custom_call.1} parent=67 // pred_check_branch
          %1224 = sbr.rel (%p1222) target = $region72
        $region71: #{tpu_custom_call.1} parent=67 // pred_region
          %s1225 = sand.u32 %s160, 1
          %s1226 = scalar_lea.sflag [#allocation4], %s1225
          %s1227 = sand.u32 %s160, 1
          %s1228 = smul.addr %s1227, 32
          %s1229 = scalar_lea.vmem [#allocation10], %s1228
          %1230 = dma.done %s1226, 512
        $region72: #{tpu_custom_call.1} parent=67 // pred_fallthru
          _
        // Predicated region
        $region73: #{tpu_custom_call.1} parent=67 // pred_check
          %p1231 = pneg %p201
        $region74: #{tpu_custom_call.1} parent=67 // pred_check_branch
          %1233 = sbr.rel (%p1231) target = $region76
        $region75: #{tpu_custom_call.1} parent=67 // pred_region
          %s1234 = sand.u32 %s186, 1
          %s1235 = scalar_lea.sflag [#allocation12], %s1234
          %s1236 = sand.u32 %s186, 1
          %s1237 = smul.addr %s1236, 32
          %s1238 = scalar_lea.vmem [#allocation11], %s1237
          %1239 = dma.done %s1235, 512
        $region76: #{tpu_custom_call.1} parent=67 // pred_fallthru
          _
      $region68: #{tpu_custom_call.1} parent=5 // pred_fallthru
        _
    $region6: #{tpu_custom_call.1} parent=1 // loop_footer
      %s30 = sadd.s32 1, %s26
    $region7: #{tpu_custom_call.1} parent=1 // loop_footer_branch
      %25 = sbr.rel target = $region3
    $region8: #{tpu_custom_call.1} parent=1 // loop_exit
      _
    %1240 = vsyncpa [#allocation3], 1
    %s1241 = scalar_lea.sflag [#allocation3], 1
    %1242 = vsyncpa %s1241, 1
    %1243 = vsyncpa [#allocation6], 1
    %s1244 = scalar_lea.sflag [#allocation6], 1
    %1245 = vsyncpa %s1244, 1
    %1246 = vsyncpa [#allocation9], 1
    %1247 = vsyncpa [#allocation4], 1
    %s1248 = scalar_lea.sflag [#allocation4], 1
    %1249 = vsyncpa %s1248, 1
    %1250 = vsyncpa [#allocation12], 1
    %s1251 = scalar_lea.sflag [#allocation12], 1
    %1252 = vsyncpa %s1251, 1

</llo_original>
